<compile_context>
chip_gen: v5e
topology: v5e:2x2
jax: 0.10.0
libtpu: 0.0.40
codegen_flags: <defaults>
</compile_context>

<pallas_src>
import functools
import math

import jax
import jax.numpy as jnp
from jax.experimental import pallas as pl
from jax.experimental.pallas import tpu as pltpu


# ----------------------------- Pallas kernel --------------------------------
def _conv_taps_kernel(x_ref, w_ref, b_ref, o_ref, *, n_kh, n_kw, wp, mw):
    """One sample per grid step.

    x_ref: (1, C, Lp)       zero-padded image, H/W flattened row-major (+tail)
    w_ref: (KH*KW, COUT, C) conv weight regrouped per tap
    b_ref: (COUT, 1)        bias (f32)
    o_ref: (1, COUT, Mw)    Mw = Hout*Wp  (lane-dense "wide" output)
    """
    x_all = x_ref[0]          # (C, Lp)   loaded once into vregs
    w_all = w_ref[...]        # (KH*KW, COUT, C)
    cout = o_ref.shape[1]

    acc = jnp.zeros((cout, mw), jnp.float32)
    for dy in range(n_kh):                       # static 3x3 tap loop, unrolled
        for dx in range(n_kw):
            off = dy * wp + dx                   # static shift into flat image
            x_tap = x_all[:, off:off + mw]       # (C, Mw) shifted window
            w_tap = w_all[dy * n_kw + dx]        # (COUT, C)
            acc = acc + jnp.dot(w_tap, x_tap,
                                preferred_element_type=jnp.float32)

    o_ref[0] = jnp.maximum(acc + b_ref[...], 0.0).astype(o_ref.dtype)


# ----------------------------- BasicConv2d -----------------------------------
def basic_conv2d(x, weight, bias, *, padding=1, stride=1, compute_dtype=None):
    """relu(conv2d(x, weight, bias, stride=1, padding)) in NCHW, like PyTorch.

    x:      [N, C_in, H, W]
    weight: [C_out, C_in, KH, KW]
    bias:   [C_out]
    compute_dtype: None -> keep input dtype (f32);
                   jnp.bfloat16 recommended on v6e/v7x (MXU-native operands).
    """
    N, C, H, W = x.shape
    COUT, CIN, KH, KW = weight.shape
    assert CIN == C
    # TODO(synk): stride > 1 / dilation > 1 not implemented in the
    # shifted-window kernel (this module instantiation uses the defaults).
    assert stride == 1

    Hout = H + 2 * padding - KH + 1
    Wout = W + 2 * padding - KW + 1
    Hp, Wp = H + 2 * padding, W + 2 * padding
    Mw = Hout * Wp                      # wide (padded-width) output length
    tail = KW - 1                       # extra zeros so every tap slice is in-bounds
    Lp = Hp * Wp + tail

    # --- cheap 1x-data wrapper glue (pad + flatten; no 9x im2col) ---
    xp = jnp.pad(x, ((0, 0), (0, 0), (padding, padding), (padding, padding)))
    xf = xp.reshape(N, C, Hp * Wp)
    xf = jnp.pad(xf, ((0, 0), (0, 0), (0, tail)))            # (N, C, Lp)

    # Weight regrouped per tap: (KH, KW, COUT, C) -> (KH*KW, COUT, C). Tiny.
    w_taps = jnp.transpose(weight, (2, 3, 0, 1)).reshape(KH * KW, COUT, C)
    bias2d = bias.reshape(COUT, 1).astype(jnp.float32)

    if compute_dtype is not None:
        xf = xf.astype(compute_dtype)
        w_taps = w_taps.astype(compute_dtype)

    kernel = functools.partial(_conv_taps_kernel,
                               n_kh=KH, n_kw=KW, wp=Wp, mw=Mw)

    out_wide = pl.pallas_call(
        kernel,
        out_shape=jax.ShapeDtypeStruct((N, COUT, Mw), jnp.float32),
        grid=(N,),
        in_specs=[
            pl.BlockSpec((1, C, Lp), lambda n: (n, 0, 0)),          # one sample
            pl.BlockSpec((KH * KW, COUT, C), lambda n: (0, 0, 0)),  # full weight
            pl.BlockSpec((COUT, 1), lambda n: (0, 0)),              # bias
        ],
        out_specs=pl.BlockSpec((1, COUT, Mw), lambda n: (n, 0, 0)),
        compiler_params=pltpu.CompilerParams(
            dimension_semantics=("parallel",)),
    )(xf, w_taps, bias2d)

    # (N, COUT, Hout, Wp) -> drop padded-width columns -> NCHW. No transpose.
    out = out_wide.reshape(N, COUT, Hout, Wp)[:, :, :, :Wout]
    return out


# --------------------------------- main ---------------------------------------
if __name__ == "__main__":
    key = jax.random.PRNGKey(0)
    k_x, k_w, k_b = jax.random.split(key, 3)

    N, CIN, H, W = 2, 4, 16, 16
    COUT, KH, KW = 8, 3, 3
    PAD = 1

    x = jax.random.normal(k_x, (N, CIN, H, W), dtype=jnp.float32)

    # Deterministic init (mimics PyTorch's uniform(-1/sqrt(fan_in), ...)).
    fan_in = CIN * KH * KW
    bound = 1.0 / math.sqrt(fan_in)
    weight = jax.random.uniform(k_w, (COUT, CIN, KH, KW), jnp.float32, -bound, bound)
    bias = jax.random.uniform(k_b, (COUT,), jnp.float32, -bound, bound)

    # Reference (XLA conv + relu), f32.
    y_ref = jax.nn.relu(
        jax.lax.conv_general_dilated(
            x, weight, window_strides=(1, 1), padding=[(PAD, PAD), (PAD, PAD)],
            dimension_numbers=("NCHW", "OIHW", "NCHW"),
        )
        + bias.reshape(1, COUT, 1, 1)
    )

    # f32 path (exact semantics match).
    fwd = jax.jit(functools.partial(basic_conv2d, padding=PAD, stride=1))
    y = fwd(x, weight, bias)
    jax.block_until_ready(y)
    assert y.shape == (N, COUT, H, W)
    assert jnp.allclose(y, y_ref, atol=1e-4, rtol=1e-4)

    # bf16-operand path (v6e/v7x MXU-native); f32 accumulate -> looser tolerance.
    fwd_bf16 = jax.jit(functools.partial(
        basic_conv2d, padding=PAD, stride=1, compute_dtype=jnp.bfloat16))
    y_bf16 = fwd_bf16(x, weight, bias)
    jax.block_until_ready(y_bf16)
    assert y_bf16.shape == (N, COUT, H, W)
    assert jnp.allclose(y_bf16, y_ref, atol=5e-2, rtol=5e-2)

    print("KERNEL_OK")
</pallas_src>

<mosaic_0001>
module attributes {stable_mosaic.version = 11 : i64} {
  func.func @_conv_taps_kernel(%arg0: i32, %arg1: memref<1x4x326xf32, #tpu.memory_space<vmem>>, %arg2: memref<9x8x4xf32, #tpu.memory_space<vmem>>, %arg3: memref<8x1xf32, #tpu.memory_space<vmem>>, %arg4: memref<1x8x288xf32, #tpu.memory_space<vmem>>) attributes {dimension_semantics = [#tpu.dimension_semantics<parallel>], iteration_bounds = array<i64: 2>, scalar_prefetch = 0 : i64, scratch_operands = 0 : i64, tpu.core_type = #tpu.core_type<tc>, window_params = [{transform_indices = @transform_0, window_bounds = array<i64: 1, 4, 326>}, {pipeline_mode = #tpu.pipeline_mode<synchronous>, transform_indices = @transform_1, window_bounds = array<i64: 9, 8, 4>}, {pipeline_mode = #tpu.pipeline_mode<synchronous>, transform_indices = @transform_2, window_bounds = array<i64: 8, 1>}, {transform_indices = @transform_3, window_bounds = array<i64: 1, 8, 288>}]} {
    %c0 = arith.constant 0 : index
    %c0_0 = arith.constant 0 : index
    %c0_1 = arith.constant 0 : index
    %0 = vector.load %arg1[%c0, %c0_0, %c0_1] : memref<1x4x326xf32, #tpu.memory_space<vmem>>, vector<1x4x326xf32>
    %1 = vector.shape_cast %0 : vector<1x4x326xf32> to vector<4x326xf32>
    %c0_2 = arith.constant 0 : index
    %c0_3 = arith.constant 0 : index
    %c0_4 = arith.constant 0 : index
    %2 = vector.load %arg2[%c0_2, %c0_3, %c0_4] : memref<9x8x4xf32, #tpu.memory_space<vmem>>, vector<9x8x4xf32>
    %cst = arith.constant 0.000000e+00 : f32
    %3 = vector.broadcast %cst : f32 to vector<8x288xf32>
    %4 = vector.extract_strided_slice %1 {offsets = [0, 0], sizes = [4, 288], strides = [1, 1]} : vector<4x326xf32> to vector<4x288xf32>
    %5 = vector.extract_strided_slice %2 {offsets = [0, 0, 0], sizes = [1, 8, 4], strides = [1, 1, 1]} : vector<9x8x4xf32> to vector<1x8x4xf32>
    %6 = vector.shape_cast %5 : vector<1x8x4xf32> to vector<8x4xf32>
    %cst_5 = arith.constant dense<0.000000e+00> : vector<8x288xf32>
    %7 = tpu.matmul %6, %4, %cst_5 {dimension_numbers = #tpu.dot_dimension_numbers<[1], [0], [0], [1], [0, 0, 1, 1], [], []>} : vector<8x4xf32>, vector<4x288xf32>, vector<8x288xf32> -> vector<8x288xf32>
    %8 = arith.addf %3, %7 : vector<8x288xf32>
    %9 = vector.extract_strided_slice %1 {offsets = [0, 1], sizes = [4, 288], strides = [1, 1]} : vector<4x326xf32> to vector<4x288xf32>
    %10 = vector.extract_strided_slice %2 {offsets = [1, 0, 0], sizes = [1, 8, 4], strides = [1, 1, 1]} : vector<9x8x4xf32> to vector<1x8x4xf32>
    %11 = vector.shape_cast %10 : vector<1x8x4xf32> to vector<8x4xf32>
    %cst_6 = arith.constant dense<0.000000e+00> : vector<8x288xf32>
    %12 = tpu.matmul %11, %9, %cst_6 {dimension_numbers = #tpu.dot_dimension_numbers<[1], [0], [0], [1], [0, 0, 1, 1], [], []>} : vector<8x4xf32>, vector<4x288xf32>, vector<8x288xf32> -> vector<8x288xf32>
    %13 = arith.addf %8, %12 : vector<8x288xf32>
    %14 = vector.extract_strided_slice %1 {offsets = [0, 2], sizes = [4, 288], strides = [1, 1]} : vector<4x326xf32> to vector<4x288xf32>
    %15 = vector.extract_strided_slice %2 {offsets = [2, 0, 0], sizes = [1, 8, 4], strides = [1, 1, 1]} : vector<9x8x4xf32> to vector<1x8x4xf32>
    %16 = vector.shape_cast %15 : vector<1x8x4xf32> to vector<8x4xf32>
    %cst_7 = arith.constant dense<0.000000e+00> : vector<8x288xf32>
    %17 = tpu.matmul %16, %14, %cst_7 {dimension_numbers = #tpu.dot_dimension_numbers<[1], [0], [0], [1], [0, 0, 1, 1], [], []>} : vector<8x4xf32>, vector<4x288xf32>, vector<8x288xf32> -> vector<8x288xf32>
    %18 = arith.addf %13, %17 : vector<8x288xf32>
    %19 = vector.extract_strided_slice %1 {offsets = [0, 18], sizes = [4, 288], strides = [1, 1]} : vector<4x326xf32> to vector<4x288xf32>
    %20 = vector.extract_strided_slice %2 {offsets = [3, 0, 0], sizes = [1, 8, 4], strides = [1, 1, 1]} : vector<9x8x4xf32> to vector<1x8x4xf32>
    %21 = vector.shape_cast %20 : vector<1x8x4xf32> to vector<8x4xf32>
    %cst_8 = arith.constant dense<0.000000e+00> : vector<8x288xf32>
    %22 = tpu.matmul %21, %19, %cst_8 {dimension_numbers = #tpu.dot_dimension_numbers<[1], [0], [0], [1], [0, 0, 1, 1], [], []>} : vector<8x4xf32>, vector<4x288xf32>, vector<8x288xf32> -> vector<8x288xf32>
    %23 = arith.addf %18, %22 : vector<8x288xf32>
    %24 = vector.extract_strided_slice %1 {offsets = [0, 19], sizes = [4, 288], strides = [1, 1]} : vector<4x326xf32> to vector<4x288xf32>
    %25 = vector.extract_strided_slice %2 {offsets = [4, 0, 0], sizes = [1, 8, 4], strides = [1, 1, 1]} : vector<9x8x4xf32> to vector<1x8x4xf32>
    %26 = vector.shape_cast %25 : vector<1x8x4xf32> to vector<8x4xf32>
    %cst_9 = arith.constant dense<0.000000e+00> : vector<8x288xf32>
    %27 = tpu.matmul %26, %24, %cst_9 {dimension_numbers = #tpu.dot_dimension_numbers<[1], [0], [0], [1], [0, 0, 1, 1], [], []>} : vector<8x4xf32>, vector<4x288xf32>, vector<8x288xf32> -> vector<8x288xf32>
    %28 = arith.addf %23, %27 : vector<8x288xf32>
    %29 = vector.extract_strided_slice %1 {offsets = [0, 20], sizes = [4, 288], strides = [1, 1]} : vector<4x326xf32> to vector<4x288xf32>
    %30 = vector.extract_strided_slice %2 {offsets = [5, 0, 0], sizes = [1, 8, 4], strides = [1, 1, 1]} : vector<9x8x4xf32> to vector<1x8x4xf32>
    %31 = vector.shape_cast %30 : vector<1x8x4xf32> to vector<8x4xf32>
    %cst_10 = arith.constant dense<0.000000e+00> : vector<8x288xf32>
    %32 = tpu.matmul %31, %29, %cst_10 {dimension_numbers = #tpu.dot_dimension_numbers<[1], [0], [0], [1], [0, 0, 1, 1], [], []>} : vector<8x4xf32>, vector<4x288xf32>, vector<8x288xf32> -> vector<8x288xf32>
    %33 = arith.addf %28, %32 : vector<8x288xf32>
    %34 = vector.extract_strided_slice %1 {offsets = [0, 36], sizes = [4, 288], strides = [1, 1]} : vector<4x326xf32> to vector<4x288xf32>
    %35 = vector.extract_strided_slice %2 {offsets = [6, 0, 0], sizes = [1, 8, 4], strides = [1, 1, 1]} : vector<9x8x4xf32> to vector<1x8x4xf32>
    %36 = vector.shape_cast %35 : vector<1x8x4xf32> to vector<8x4xf32>
    %cst_11 = arith.constant dense<0.000000e+00> : vector<8x288xf32>
    %37 = tpu.matmul %36, %34, %cst_11 {dimension_numbers = #tpu.dot_dimension_numbers<[1], [0], [0], [1], [0, 0, 1, 1], [], []>} : vector<8x4xf32>, vector<4x288xf32>, vector<8x288xf32> -> vector<8x288xf32>
    %38 = arith.addf %33, %37 : vector<8x288xf32>
    %39 = vector.extract_strided_slice %1 {offsets = [0, 37], sizes = [4, 288], strides = [1, 1]} : vector<4x326xf32> to vector<4x288xf32>
    %40 = vector.extract_strided_slice %2 {offsets = [7, 0, 0], sizes = [1, 8, 4], strides = [1, 1, 1]} : vector<9x8x4xf32> to vector<1x8x4xf32>
    %41 = vector.shape_cast %40 : vector<1x8x4xf32> to vector<8x4xf32>
    %cst_12 = arith.constant dense<0.000000e+00> : vector<8x288xf32>
    %42 = tpu.matmul %41, %39, %cst_12 {dimension_numbers = #tpu.dot_dimension_numbers<[1], [0], [0], [1], [0, 0, 1, 1], [], []>} : vector<8x4xf32>, vector<4x288xf32>, vector<8x288xf32> -> vector<8x288xf32>
    %43 = arith.addf %38, %42 : vector<8x288xf32>
    %44 = vector.extract_strided_slice %1 {offsets = [0, 38], sizes = [4, 288], strides = [1, 1]} : vector<4x326xf32> to vector<4x288xf32>
    %45 = vector.extract_strided_slice %2 {offsets = [8, 0, 0], sizes = [1, 8, 4], strides = [1, 1, 1]} : vector<9x8x4xf32> to vector<1x8x4xf32>
    %46 = vector.shape_cast %45 : vector<1x8x4xf32> to vector<8x4xf32>
    %cst_13 = arith.constant dense<0.000000e+00> : vector<8x288xf32>
    %47 = tpu.matmul %46, %44, %cst_13 {dimension_numbers = #tpu.dot_dimension_numbers<[1], [0], [0], [1], [0, 0, 1, 1], [], []>} : vector<8x4xf32>, vector<4x288xf32>, vector<8x288xf32> -> vector<8x288xf32>
    %48 = arith.addf %43, %47 : vector<8x288xf32>
    %c0_14 = arith.constant 0 : index
    %c0_15 = arith.constant 0 : index
    %49 = vector.load %arg3[%c0_14, %c0_15] : memref<8x1xf32, #tpu.memory_space<vmem>>, vector<8x1xf32>
    %50 = vector.broadcast %49 : vector<8x1xf32> to vector<8x288xf32>
    %51 = arith.addf %48, %50 : vector<8x288xf32>
    %cst_16 = arith.constant 0.000000e+00 : f32
    %52 = vector.broadcast %cst_16 : f32 to vector<8x288xf32>
    %53 = arith.maximumf %51, %52 : vector<8x288xf32>
    %c0_17 = arith.constant 0 : index
    %c0_18 = arith.constant 0 : index
    %c0_19 = arith.constant 0 : index
    %54 = vector.load %arg4[%c0_17, %c0_18, %c0_19] : memref<1x8x288xf32, #tpu.memory_space<vmem>>, vector<1x8x288xf32>
    %55 = vector.shape_cast %54 : vector<1x8x288xf32> to vector<8x288xf32>
    %56 = vector.shape_cast %53 : vector<8x288xf32> to vector<1x8x288xf32>
    tpu.vector_store %arg4[%c0_17, %c0_18, %c0_19], %56 {strides = array<i32>} : memref<1x8x288xf32, #tpu.memory_space<vmem>>, vector<1x8x288xf32>,
    return
  }
  func.func @transform_0(%arg0: i32) -> (i32, i32, i32) {
    %c0_i32 = arith.constant 0 : i32
    %c0_i32_0 = arith.constant 0 : i32
    %c0_i32_1 = arith.constant 0 : i32
    return %arg0, %c0_i32, %c0_i32_0 : i32, i32, i32
  }
  func.func @transform_1(%arg0: i32) -> (i32, i32, i32) {
    %c0_i32 = arith.constant 0 : i32
    %c0_i32_0 = arith.constant 0 : i32
    %c0_i32_1 = arith.constant 0 : i32
    %c0_i32_2 = arith.constant 0 : i32
    return %c0_i32, %c0_i32_0, %c0_i32_1 : i32, i32, i32
  }
  func.func @transform_2(%arg0: i32) -> (i32, i32) {
    %c0_i32 = arith.constant 0 : i32
    %c0_i32_0 = arith.constant 0 : i32
    %c0_i32_1 = arith.constant 0 : i32
    return %c0_i32, %c0_i32_0 : i32, i32
  }
  func.func @transform_3(%arg0: i32) -> (i32, i32, i32) {
    %c0_i32 = arith.constant 0 : i32
    %c0_i32_0 = arith.constant 0 : i32
    %c0_i32_1 = arith.constant 0 : i32
    return %arg0, %c0_i32, %c0_i32_0 : i32, i32, i32
  }
}

</mosaic_0001>

<llo_original>
// kernel: basic_conv2d.1
$region0: #{basic_conv2d.1}
  #allocation0 [shape = 'u32[]', space=smem, size = 0x4, offset = 0x4, fixed_abs, tag = 'smem constant byte address 0x4 - core index']
  #allocation1 [shape = 'u32[72,128]{1,0:T(1,128)}', space=vmem, size = 0x9000, scoped, tag = 'internal scratch']
  %s0 = inlined_call_operand.vmem [shape: f32[2,4,326], index: 0, kind: input, shape index: {}]
  %s1 = inlined_call_operand.vmem [shape: f32[9,8,4], index: 1, kind: input, shape index: {}]
  %s2 = inlined_call_operand.vmem [shape: f32[8,1], index: 2, kind: input, shape index: {}]
  %s3 = inlined_call_operand.vmem [shape: f32[2,8,288], index: 3, kind: output, shape index: {}]
  %s4 = sld [smem:[#allocation0]]
  $region45: #{basic_conv2d.1} parent=0
    _
  %s6 = ssub.s32 1, %s4
  %s7 = scalar_select 0, %s6, %s4
  loop: start=0, step=1, limit=4
  $region2: #{basic_conv2d.1} parent=0 // loop_pre_header
    _
  $region3: #{basic_conv2d.1} parent=0 // loop_header
    %s9 = sphi 0, %s13
    %p10 = scmp.ge.s32.totalorder %s9, 4
    %s19 = sphi 0, %s21
    %s22 = sphi 0, %s19
    %s23 = sphi 0, %s22
    %s39 = sphi 0, %s23
    %s43 = sphi 0, %s43
    %s45 = sphi 0, %s43
    %s46 = sphi 0, %s45
    %s60 = sphi 0, %s46
    %s64 = sphi 0, %s64
    %s66 = sphi 0, %s64
    %s67 = sphi 0, %s66
    %s81 = sphi 0, %s67
    %s87 = sphi 0, %s89
    %s90 = sphi 0, %s87
    %s91 = sphi 0, %s90
    %s107 = sphi 0, %s91
  $region4: #{basic_conv2d.1} parent=0 // loop_header_branch
    %12 = sbr.rel (%p10) target = $region8
  $region5: #{basic_conv2d.1} parent=0 // loop_body
    %s14 = ssub.s32 %s9, 1
    %s15 = ssub.s32 %s9, 2
    %s16 = sadd.s32 %s9, 1
    %s17 = ssub.s32 %s9, %s16
    %p18 = scmp.eq.s32.totalorder %s17, 0
    %s20 = sadd.s32 %s19, 1
    %s21 = scalar_select %p18, %s19, %s20
    %p24 = pneg %p18
    %p25 = scmp.eq.s32.totalorder %s9, 1
    %p26 = por %p24, %p25
    %p27 = scmp.ne.s32.totalorder %s19, %s22
    %p28 = scmp.eq.s32.totalorder %s9, 0
    %p29 = por %p27, %p28
    %p30 = scmp.ne.s32.totalorder %s19, %s22
    %p31 = scmp.eq.s32.totalorder %s14, 1
    %p32 = por %p30, %p31
    %p33 = scmp.ne.s32.totalorder %s22, %s23
    %p34 = scmp.eq.s32.totalorder %s14, 0
    %p35 = por %p33, %p34
    %p36 = scmp.ne.s32.totalorder %s22, %s23
    %p37 = scmp.eq.s32.totalorder %s15, 1
    %p38 = por %p36, %p37
    %p40 = scmp.ne.s32.totalorder %s23, %s39
    %p41 = scmp.eq.s32.totalorder %s15, 0
    %p42 = por %p40, %p41
    %s44 = sadd.s32 %s43, 1
    %p47 = scmp.eq.s32.totalorder %s9, 1
    %p48 = scmp.ne.s32.totalorder %s43, %s45
    %p49 = scmp.eq.s32.totalorder %s9, 0
    %p50 = por %p48, %p49
    %p51 = scmp.ne.s32.totalorder %s43, %s45
    %p52 = scmp.eq.s32.totalorder %s14, 1
    %p53 = por %p51, %p52
    %p54 = scmp.ne.s32.totalorder %s45, %s46
    %p55 = scmp.eq.s32.totalorder %s14, 0
    %p56 = por %p54, %p55
    %p57 = scmp.ne.s32.totalorder %s45, %s46
    %p58 = scmp.eq.s32.totalorder %s15, 1
    %p59 = por %p57, %p58
    %p61 = scmp.ne.s32.totalorder %s46, %s60
    %p62 = scmp.eq.s32.totalorder %s15, 0
    %p63 = por %p61, %p62
    %s65 = sadd.s32 %s64, 1
    %p68 = scmp.eq.s32.totalorder %s9, 1
    %p69 = scmp.ne.s32.totalorder %s64, %s66
    %p70 = scmp.eq.s32.totalorder %s9, 0
    %p71 = por %p69, %p70
    %p72 = scmp.ne.s32.totalorder %s64, %s66
    %p73 = scmp.eq.s32.totalorder %s14, 1
    %p74 = por %p72, %p73
    %p75 = scmp.ne.s32.totalorder %s66, %s67
    %p76 = scmp.eq.s32.totalorder %s14, 0
    %p77 = por %p75, %p76
    %p78 = scmp.ne.s32.totalorder %s66, %s67
    %p79 = scmp.eq.s32.totalorder %s15, 1
    %p80 = por %p78, %p79
    %p82 = scmp.ne.s32.totalorder %s67, %s81
    %p83 = scmp.eq.s32.totalorder %s15, 0
    %p84 = por %p82, %p83
    %s85 = ssub.s32 %s9, %s16
    %p86 = scmp.eq.s32.totalorder %s85, 0
    %s88 = sadd.s32 %s87, 1
    %s89 = scalar_select %p86, %s87, %s88
    %p92 = pneg %p86
    %p93 = scmp.eq.s32.totalorder %s9, 1
    %p94 = por %p92, %p93
    %p95 = scmp.ne.s32.totalorder %s87, %s90
    %p96 = scmp.eq.s32.totalorder %s9, 0
    %p97 = por %p95, %p96
    %p98 = scmp.ne.s32.totalorder %s87, %s90
    %p99 = scmp.eq.s32.totalorder %s14, 1
    %p100 = por %p98, %p99
    %p101 = scmp.ne.s32.totalorder %s90, %s91
    %p102 = scmp.eq.s32.totalorder %s14, 0
    %p103 = por %p101, %p102
    %p104 = scmp.ne.s32.totalorder %s90, %s91
    %p105 = scmp.eq.s32.totalorder %s15, 1
    %p106 = por %p104, %p105
    %p108 = scmp.ne.s32.totalorder %s91, %s107
    %p109 = scmp.eq.s32.totalorder %s15, 0
    %p110 = por %p108, %p109
    %p111 = scmp.le.s32.totalorder 1, %s9
    %p112 = scmp.lt.s32.totalorder %s9, 3
    %p113 = pnand %p111, %p112
    %p114 = pneg %p113
    // Predicated region
    $region9: #{basic_conv2d.1} parent=5 // pred_check
      _
    $region10: #{basic_conv2d.1} parent=5 // pred_check_branch
      %116 = sbr.rel (%p113) target = $region12
    $region11: #{basic_conv2d.1} parent=5 // pred_region
      %s117 = ssub.s32 %s9, 1
      // Predicated region
      $region13: #{basic_conv2d.1} parent=11 // pred_check
        %p118 = pneg %p56
      $region14: #{basic_conv2d.1} parent=11 // pred_check_branch
        %120 = sbr.rel (%p118) target = $region16
      $region15: #{basic_conv2d.1} parent=11 // pred_region
        _
      $region16: #{basic_conv2d.1} parent=11 // pred_fallthru
        _
      // Predicated region
      $region17: #{basic_conv2d.1} parent=11 // pred_check
        %p121 = pneg %p77
      $region18: #{basic_conv2d.1} parent=11 // pred_check_branch
        %123 = sbr.rel (%p121) target = $region20
      $region19: #{basic_conv2d.1} parent=11 // pred_region
        _
      $region20: #{basic_conv2d.1} parent=11 // pred_fallthru
        _
    $region12: #{basic_conv2d.1} parent=5 // pred_fallthru
      _
    %p124 = scmp.lt.s32.totalorder %s9, 2
    // Predicated region
    $region21: #{basic_conv2d.1} parent=5 // pred_check
      %p125 = pneg %p124
    $region22: #{basic_conv2d.1} parent=5 // pred_check_branch
      %127 = sbr.rel (%p125) target = $region24
    $region23: #{basic_conv2d.1} parent=5 // pred_region
      // Predicated region
      $region25: #{basic_conv2d.1} parent=23 // pred_check
        %p128 = pneg %p29
      $region26: #{basic_conv2d.1} parent=23 // pred_check_branch
        %130 = sbr.rel (%p128) target = $region28
      $region27: #{basic_conv2d.1} parent=23 // pred_region
        %p131 = scmp.lt.s32.totalorder %s9, 1
        %s132 = scalar_select %p131, %s9, 1
        %s133 = smul.addr %s132, 3
        %s134 = smul.addr %s133, 4
        %s135 = scalar_lea.vmem %s0, %s134
      $region28: #{basic_conv2d.1} parent=23 // pred_fallthru
        _
    $region24: #{basic_conv2d.1} parent=5 // pred_fallthru
      _
    %p136 = scmp.le.s32.totalorder 1, %s9
    %p137 = scmp.lt.s32.totalorder %s9, 3
    %p138 = pnand %p136, %p137
    %p139 = pneg %p138
    // Predicated region
    $region29: #{basic_conv2d.1} parent=5 // pred_check
      _
    $region30: #{basic_conv2d.1} parent=5 // pred_check_branch
      %141 = sbr.rel (%p138) target = $region32
    $region31: #{basic_conv2d.1} parent=5 // pred_region
      %s142 = ssub.s32 %s9, 1
      %p143 = scmp.lt.s32.totalorder %s14, 1
      %s144 = scalar_select %p143, %s14, 1
      %s145 = smul.addr %s144, 3
      %s146 = smul.addr %s145, 4
      %s147 = scalar_lea.vmem %s0, %s146
      %p148 = pneg %p35
      %p149 = pneg %p32
      %p150 = pneg %p56
      %p151 = pneg %p53
      %p152 = pneg %p77
      %p153 = pneg %p74
      %p154 = pneg %p103
      %p155 = pneg %p100
      %p156 = scmp.lt.s32.totalorder %s14, 1
      %s157 = scalar_select %p156, %s14, 1
      %s158 = smul.addr %s157, 3
      %s159 = smul.addr %s158, 8
      %s160 = scalar_lea.vmem %s3, %s159
      %p161 = scmp.lt.s32.totalorder %s14, 1
      %s162 = scalar_select %p161, %s14, 1
      %s163 = smul.addr %s162, 3
      %s164 = smul.addr %s163, 4
      %s165 = scalar_lea.vmem %s0, %s164
      %p166 = scmp.lt.s32.totalorder %s14, 1
      %s167 = scalar_select %p166, %s14, 1
      %s168 = smul.addr %s167, 3
      %s169 = smul.addr %s168, 8
      %s170 = scalar_lea.vmem %s3, %s169
      %v171 = vld [vmem:[%s165] sm:$0xff]
      %v172 = vld [vmem:[%s165 + $0x8] sm:$0xf]
      %v173 = vld [vmem:[%s1] sm:$0xff]
      %v174 = vld [vmem:[%s1 + $0x8] sm:$0xff]
      %v175 = vld [vmem:[%s1 + $0x10] sm:$0xff]
      %v176 = vld [vmem:[%s1 + $0x18] sm:$0xff]
      %v177 = vld [vmem:[%s1 + $0x20] sm:$0xff]
      %v178 = vld [vmem:[%s1 + $0x28] sm:$0xff]
      %v179 = vld [vmem:[%s1 + $0x30] sm:$0xff]
      %v180 = vld [vmem:[%s1 + $0x38] sm:$0xff]
      %v181 = vld [vmem:[%s1 + $0x40] sm:$0xff]
      %184 = vst [vmem:[#allocation1] ss:$2 sm:$0xff] %v171
      %s185 = scalar_lea.vmem [#allocation1], 16
      %186 = vst [vmem:[%s185] ss:$2 sm:$0xff] %v172
      %v187 = vld.sshfl [vmem:[#allocation1] sm:$0xff pattern:$0x75316420]
      %v188 = vld.sshfl [vmem:[#allocation1 + $0x8] sm:$0xff pattern:$0x75316420]
      %v189 = vld.sshfl [vmem:[#allocation1 + $0x10] sm:$0xff pattern:$0x75316420]
      %190 = vrot.lane.b32.xlu0 %v187, 127
      %v191 = vpop.permute.xlu0 %190
      %192 = vrot.lane.b32.xlu0 %v188, 127
      %v193 = vpop.permute.xlu0 %192
      %194 = vrot.lane.b32.xlu0 %v189, 127
      %v195 = vpop.permute.xlu0 %194
      %vm196 = vcmask 1039360
      %v197 = vsel %vm196, %v191, %v193
      %v198 = vsel %vm196, %v193, %v195
      %vm199 = vcmask 31744
      %v201 = vsel %vm199, %v174, 0
      %vm203 = vcmask 1043456
      %v204 = vsel %vm203, %v197, 0
      %v206 = vsel %vm203, %v198, 0
      %v208 = vsel %vm203, %v195, 0
      %210 = vmatpush.msra.mxu0 0.0
      %211 = vmatpush.msra.mxu0 0.0
      %212 = vmatpush.msra.mxu0 0.0
      %213 = vmatpush.msra.mxu0 0.0
      %214 = vmatpush.msra.mxu0 0.0
      %215 = vmatpush.msra.mxu0 0.0
      %216 = vmatpush.msra.mxu0 0.0
      %217 = vmatpush.msra.mxu0 0.0
      %218 = vmatpush.msra.mxu0 0.0
      %219 = vmatpush.msra.mxu0 0.0
      %220 = vmatpush.msra.mxu0 0.0
      %221 = vmatpush.msra.mxu0 0.0
      %222 = vmatpush.msra.mxu0 0.0
      %223 = vmatpush.msra.mxu0 0.0
      %224 = vmatpush.msra.mxu0 0.0
      %225 = vmatpush.msra.mxu0 %v204
      %226 = vmatmul.f32.gmra.mxu0 %v201
      %v227 = vpop.f32.mrf.mxu0
      %v228 = vadd.f32 0.0, %v227
      %229 = vdwg.mxu0
      %230 = vmatpush.msra.mxu0 0.0
      %231 = vmatpush.msra.mxu0 0.0
      %232 = vmatpush.msra.mxu0 0.0
      %233 = vmatpush.msra.mxu0 0.0
      %234 = vmatpush.msra.mxu0 0.0
      %235 = vmatpush.msra.mxu0 0.0
      %236 = vmatpush.msra.mxu0 0.0
      %237 = vmatpush.msra.mxu0 0.0
      %238 = vmatpush.msra.mxu0 0.0
      %239 = vmatpush.msra.mxu0 0.0
      %240 = vmatpush.msra.mxu0 0.0
      %241 = vmatpush.msra.mxu0 0.0
      %242 = vmatpush.msra.mxu0 0.0
      %243 = vmatpush.msra.mxu0 0.0
      %244 = vmatpush.msra.mxu0 0.0
      %245 = vmatpush.msra.mxu0 %v206
      %246 = vmatmul.f32.gmra.mxu0 %v201
      %v247 = vpop.f32.mrf.mxu0
      %v248 = vadd.f32 0.0, %v247
      %249 = vdwg.mxu0
      %250 = vmatpush.msra.mxu0 0.0
      %251 = vmatpush.msra.mxu0 0.0
      %252 = vmatpush.msra.mxu0 0.0
      %253 = vmatpush.msra.mxu0 0.0
      %254 = vmatpush.msra.mxu0 0.0
      %255 = vmatpush.msra.mxu0 0.0
      %256 = vmatpush.msra.mxu0 0.0
      %257 = vmatpush.msra.mxu0 0.0
      %258 = vmatpush.msra.mxu0 0.0
      %259 = vmatpush.msra.mxu0 0.0
      %260 = vmatpush.msra.mxu0 0.0
      %261 = vmatpush.msra.mxu0 0.0
      %262 = vmatpush.msra.mxu0 0.0
      %263 = vmatpush.msra.mxu0 0.0
      %264 = vmatpush.msra.mxu0 0.0
      %265 = vmatpush.msra.mxu0 %v208
      %266 = vmatmul.f32.gmra.mxu0 %v201
      %v267 = vpop.f32.mrf.mxu0
      %v268 = vadd.f32 0.0, %v267
      %269 = vdwg.mxu0
      %270 = vst [vmem:[#allocation1] ss:$2 sm:$0xff] %v171
      %s271 = scalar_lea.vmem [#allocation1], 16
      %272 = vst [vmem:[%s271] ss:$2 sm:$0xff] %v172
      %v273 = vld.sshfl [vmem:[#allocation1] sm:$0xff pattern:$0x75316420]
      %v274 = vld.sshfl [vmem:[#allocation1 + $0x8] sm:$0xff pattern:$0x75316420]
      %v275 = vld.sshfl [vmem:[#allocation1 + $0x10] sm:$0xff pattern:$0x75316420]
      %v277 = vsel %vm199, %v173, 0
      %v279 = vsel %vm203, %v273, 0
      %v281 = vsel %vm203, %v274, 0
      %v283 = vsel %vm203, %v275, 0
      %285 = vmatpush.msra.mxu0 0.0
      %286 = vmatpush.msra.mxu0 0.0
      %287 = vmatpush.msra.mxu0 0.0
      %288 = vmatpush.msra.mxu0 0.0
      %289 = vmatpush.msra.mxu0 0.0
      %290 = vmatpush.msra.mxu0 0.0
      %291 = vmatpush.msra.mxu0 0.0
      %292 = vmatpush.msra.mxu0 0.0
      %293 = vmatpush.msra.mxu0 0.0
      %294 = vmatpush.msra.mxu0 0.0
      %295 = vmatpush.msra.mxu0 0.0
      %296 = vmatpush.msra.mxu0 0.0
      %297 = vmatpush.msra.mxu0 0.0
      %298 = vmatpush.msra.mxu0 0.0
      %299 = vmatpush.msra.mxu0 0.0
      %300 = vmatpush.msra.mxu0 %v279
      %301 = vmatmul.f32.gmra.mxu0 %v277
      %v302 = vpop.f32.mrf.mxu0
      %v303 = vadd.f32 %v228, %v302
      %304 = vdwg.mxu0
      %305 = vmatpush.msra.mxu0 0.0
      %306 = vmatpush.msra.mxu0 0.0
      %307 = vmatpush.msra.mxu0 0.0
      %308 = vmatpush.msra.mxu0 0.0
      %309 = vmatpush.msra.mxu0 0.0
      %310 = vmatpush.msra.mxu0 0.0
      %311 = vmatpush.msra.mxu0 0.0
      %312 = vmatpush.msra.mxu0 0.0
      %313 = vmatpush.msra.mxu0 0.0
      %314 = vmatpush.msra.mxu0 0.0
      %315 = vmatpush.msra.mxu0 0.0
      %316 = vmatpush.msra.mxu0 0.0
      %317 = vmatpush.msra.mxu0 0.0
      %318 = vmatpush.msra.mxu0 0.0
      %319 = vmatpush.msra.mxu0 0.0
      %320 = vmatpush.msra.mxu0 %v281
      %321 = vmatmul.f32.gmra.mxu0 %v277
      %v322 = vpop.f32.mrf.mxu0
      %v323 = vadd.f32 %v248, %v322
      %324 = vdwg.mxu0
      %325 = vmatpush.msra.mxu0 0.0
      %326 = vmatpush.msra.mxu0 0.0
      %327 = vmatpush.msra.mxu0 0.0
      %328 = vmatpush.msra.mxu0 0.0
      %329 = vmatpush.msra.mxu0 0.0
      %330 = vmatpush.msra.mxu0 0.0
      %331 = vmatpush.msra.mxu0 0.0
      %332 = vmatpush.msra.mxu0 0.0
      %333 = vmatpush.msra.mxu0 0.0
      %334 = vmatpush.msra.mxu0 0.0
      %335 = vmatpush.msra.mxu0 0.0
      %336 = vmatpush.msra.mxu0 0.0
      %337 = vmatpush.msra.mxu0 0.0
      %338 = vmatpush.msra.mxu0 0.0
      %339 = vmatpush.msra.mxu0 0.0
      %340 = vmatpush.msra.mxu0 %v283
      %341 = vmatmul.f32.gmra.mxu0 %v277
      %v342 = vpop.f32.mrf.mxu0
      %v343 = vadd.f32 %v268, %v342
      %344 = vdwg.mxu0
      %345 = vst [vmem:[#allocation1] ss:$2 sm:$0xff] %v171
      %s346 = scalar_lea.vmem [#allocation1], 16
      %347 = vst [vmem:[%s346] ss:$2 sm:$0xff] %v172
      %v348 = vld.sshfl [vmem:[#allocation1] sm:$0xff pattern:$0x75316420]
      %v349 = vld.sshfl [vmem:[#allocation1 + $0x8] sm:$0xff pattern:$0x75316420]
      %v350 = vld.sshfl [vmem:[#allocation1 + $0x10] sm:$0xff pattern:$0x75316420]
      %351 = vrot.lane.b32.xlu0 %v348, 126
      %v352 = vpop.permute.xlu0 %351
      %353 = vrot.lane.b32.xlu0 %v349, 126
      %v354 = vpop.permute.xlu0 %353
      %355 = vrot.lane.b32.xlu0 %v350, 126
      %v356 = vpop.permute.xlu0 %355
      %vm357 = vcmask 1031168
      %v358 = vsel %vm357, %v352, %v354
      %v359 = vsel %vm357, %v354, %v356
      %v361 = vsel %vm199, %v175, 0
      %v363 = vsel %vm203, %v358, 0
      %v365 = vsel %vm203, %v359, 0
      %v367 = vsel %vm203, %v356, 0
      %369 = vmatpush.msra.mxu0 0.0
      %370 = vmatpush.msra.mxu0 0.0
      %371 = vmatpush.msra.mxu0 0.0
      %372 = vmatpush.msra.mxu0 0.0
      %373 = vmatpush.msra.mxu0 0.0
      %374 = vmatpush.msra.mxu0 0.0
      %375 = vmatpush.msra.mxu0 0.0
      %376 = vmatpush.msra.mxu0 0.0
      %377 = vmatpush.msra.mxu0 0.0
      %378 = vmatpush.msra.mxu0 0.0
      %379 = vmatpush.msra.mxu0 0.0
      %380 = vmatpush.msra.mxu0 0.0
      %381 = vmatpush.msra.mxu0 0.0
      %382 = vmatpush.msra.mxu0 0.0
      %383 = vmatpush.msra.mxu0 0.0
      %384 = vmatpush.msra.mxu0 %v363
      %385 = vmatmul.f32.gmra.mxu0 %v361
      %v386 = vpop.f32.mrf.mxu0
      %v387 = vadd.f32 0.0, %v386
      %388 = vdwg.mxu0
      %389 = vmatpush.msra.mxu0 0.0
      %390 = vmatpush.msra.mxu0 0.0
      %391 = vmatpush.msra.mxu0 0.0
      %392 = vmatpush.msra.mxu0 0.0
      %393 = vmatpush.msra.mxu0 0.0
      %394 = vmatpush.msra.mxu0 0.0
      %395 = vmatpush.msra.mxu0 0.0
      %396 = vmatpush.msra.mxu0 0.0
      %397 = vmatpush.msra.mxu0 0.0
      %398 = vmatpush.msra.mxu0 0.0
      %399 = vmatpush.msra.mxu0 0.0
      %400 = vmatpush.msra.mxu0 0.0
      %401 = vmatpush.msra.mxu0 0.0
      %402 = vmatpush.msra.mxu0 0.0
      %403 = vmatpush.msra.mxu0 0.0
      %404 = vmatpush.msra.mxu0 %v365
      %405 = vmatmul.f32.gmra.mxu0 %v361
      %v406 = vpop.f32.mrf.mxu0
      %v407 = vadd.f32 0.0, %v406
      %408 = vdwg.mxu0
      %409 = vmatpush.msra.mxu0 0.0
      %410 = vmatpush.msra.mxu0 0.0
      %411 = vmatpush.msra.mxu0 0.0
      %412 = vmatpush.msra.mxu0 0.0
      %413 = vmatpush.msra.mxu0 0.0
      %414 = vmatpush.msra.mxu0 0.0
      %415 = vmatpush.msra.mxu0 0.0
      %416 = vmatpush.msra.mxu0 0.0
      %417 = vmatpush.msra.mxu0 0.0
      %418 = vmatpush.msra.mxu0 0.0
      %419 = vmatpush.msra.mxu0 0.0
      %420 = vmatpush.msra.mxu0 0.0
      %421 = vmatpush.msra.mxu0 0.0
      %422 = vmatpush.msra.mxu0 0.0
      %423 = vmatpush.msra.mxu0 0.0
      %424 = vmatpush.msra.mxu0 %v367
      %425 = vmatmul.f32.gmra.mxu0 %v361
      %v426 = vpop.f32.mrf.mxu0
      %v427 = vadd.f32 0.0, %v426
      %428 = vdwg.mxu0
      %v429 = vadd.f32 %v303, %v387
      %v430 = vadd.f32 %v323, %v407
      %v431 = vadd.f32 %v343, %v427
      %432 = vst [vmem:[#allocation1] ss:$2 sm:$0xff] %v171
      %s433 = scalar_lea.vmem [#allocation1], 16
      %434 = vst [vmem:[%s433] ss:$2 sm:$0xff] %v172
      %v435 = vld.sshfl [vmem:[#allocation1] sm:$0xff pattern:$0x75316420]
      %v436 = vld.sshfl [vmem:[#allocation1 + $0x8] sm:$0xff pattern:$0x75316420]
      %v437 = vld.sshfl [vmem:[#allocation1 + $0x10] sm:$0xff pattern:$0x75316420]
      %438 = vrot.lane.b32.xlu0 %v435, 110
      %v439 = vpop.permute.xlu0 %438
      %440 = vrot.lane.b32.xlu0 %v436, 110
      %v441 = vpop.permute.xlu0 %440
      %442 = vrot.lane.b32.xlu0 %v437, 110
      %v443 = vpop.permute.xlu0 %442
      %vm444 = vcmask 900096
      %v445 = vsel %vm444, %v439, %v441
      %v446 = vsel %vm444, %v441, %v443
      %v448 = vsel %vm199, %v176, 0
      %v450 = vsel %vm203, %v445, 0
      %v452 = vsel %vm203, %v446, 0
      %v454 = vsel %vm203, %v443, 0
      %456 = vmatpush.msra.mxu0 0.0
      %457 = vmatpush.msra.mxu0 0.0
      %458 = vmatpush.msra.mxu0 0.0
      %459 = vmatpush.msra.mxu0 0.0
      %460 = vmatpush.msra.mxu0 0.0
      %461 = vmatpush.msra.mxu0 0.0
      %462 = vmatpush.msra.mxu0 0.0
      %463 = vmatpush.msra.mxu0 0.0
      %464 = vmatpush.msra.mxu0 0.0
      %465 = vmatpush.msra.mxu0 0.0
      %466 = vmatpush.msra.mxu0 0.0
      %467 = vmatpush.msra.mxu0 0.0
      %468 = vmatpush.msra.mxu0 0.0
      %469 = vmatpush.msra.mxu0 0.0
      %470 = vmatpush.msra.mxu0 0.0
      %471 = vmatpush.msra.mxu0 %v450
      %472 = vmatmul.f32.gmra.mxu0 %v448
      %v473 = vpop.f32.mrf.mxu0
      %v474 = vadd.f32 0.0, %v473
      %475 = vdwg.mxu0
      %476 = vmatpush.msra.mxu0 0.0
      %477 = vmatpush.msra.mxu0 0.0
      %478 = vmatpush.msra.mxu0 0.0
      %479 = vmatpush.msra.mxu0 0.0
      %480 = vmatpush.msra.mxu0 0.0
      %481 = vmatpush.msra.mxu0 0.0
      %482 = vmatpush.msra.mxu0 0.0
      %483 = vmatpush.msra.mxu0 0.0
      %484 = vmatpush.msra.mxu0 0.0
      %485 = vmatpush.msra.mxu0 0.0
      %486 = vmatpush.msra.mxu0 0.0
      %487 = vmatpush.msra.mxu0 0.0
      %488 = vmatpush.msra.mxu0 0.0
      %489 = vmatpush.msra.mxu0 0.0
      %490 = vmatpush.msra.mxu0 0.0
      %491 = vmatpush.msra.mxu0 %v452
      %492 = vmatmul.f32.gmra.mxu0 %v448
      %v493 = vpop.f32.mrf.mxu0
      %v494 = vadd.f32 0.0, %v493
      %495 = vdwg.mxu0
      %496 = vmatpush.msra.mxu0 0.0
      %497 = vmatpush.msra.mxu0 0.0
      %498 = vmatpush.msra.mxu0 0.0
      %499 = vmatpush.msra.mxu0 0.0
      %500 = vmatpush.msra.mxu0 0.0
      %501 = vmatpush.msra.mxu0 0.0
      %502 = vmatpush.msra.mxu0 0.0
      %503 = vmatpush.msra.mxu0 0.0
      %504 = vmatpush.msra.mxu0 0.0
      %505 = vmatpush.msra.mxu0 0.0
      %506 = vmatpush.msra.mxu0 0.0
      %507 = vmatpush.msra.mxu0 0.0
      %508 = vmatpush.msra.mxu0 0.0
      %509 = vmatpush.msra.mxu0 0.0
      %510 = vmatpush.msra.mxu0 0.0
      %511 = vmatpush.msra.mxu0 %v454
      %512 = vmatmul.f32.gmra.mxu0 %v448
      %v513 = vpop.f32.mrf.mxu0
      %v514 = vadd.f32 0.0, %v513
      %515 = vdwg.mxu0
      %v516 = vadd.f32 %v429, %v474
      %v517 = vadd.f32 %v430, %v494
      %v518 = vadd.f32 %v431, %v514
      %519 = vst [vmem:[#allocation1] ss:$2 sm:$0xff] %v171
      %s520 = scalar_lea.vmem [#allocation1], 16
      %521 = vst [vmem:[%s520] ss:$2 sm:$0xff] %v172
      %v522 = vld.sshfl [vmem:[#allocation1] sm:$0xff pattern:$0x75316420]
      %v523 = vld.sshfl [vmem:[#allocation1 + $0x8] sm:$0xff pattern:$0x75316420]
      %v524 = vld.sshfl [vmem:[#allocation1 + $0x10] sm:$0xff pattern:$0x75316420]
      %525 = vrot.lane.b32.xlu0 %v522, 109
      %v526 = vpop.permute.xlu0 %525
      %527 = vrot.lane.b32.xlu0 %v523, 109
      %v528 = vpop.permute.xlu0 %527
      %529 = vrot.lane.b32.xlu0 %v524, 109
      %v530 = vpop.permute.xlu0 %529
      %vm531 = vcmask 891904
      %v532 = vsel %vm531, %v526, %v528
      %v533 = vsel %vm531, %v528, %v530
      %v535 = vsel %vm199, %v177, 0
      %v537 = vsel %vm203, %v532, 0
      %v539 = vsel %vm203, %v533, 0
      %v541 = vsel %vm203, %v530, 0
      %543 = vmatpush.msra.mxu0 0.0
      %544 = vmatpush.msra.mxu0 0.0
      %545 = vmatpush.msra.mxu0 0.0
      %546 = vmatpush.msra.mxu0 0.0
      %547 = vmatpush.msra.mxu0 0.0
      %548 = vmatpush.msra.mxu0 0.0
      %549 = vmatpush.msra.mxu0 0.0
      %550 = vmatpush.msra.mxu0 0.0
      %551 = vmatpush.msra.mxu0 0.0
      %552 = vmatpush.msra.mxu0 0.0
      %553 = vmatpush.msra.mxu0 0.0
      %554 = vmatpush.msra.mxu0 0.0
      %555 = vmatpush.msra.mxu0 0.0
      %556 = vmatpush.msra.mxu0 0.0
      %557 = vmatpush.msra.mxu0 0.0
      %558 = vmatpush.msra.mxu0 %v537
      %559 = vmatmul.f32.gmra.mxu0 %v535
      %v560 = vpop.f32.mrf.mxu0
      %v561 = vadd.f32 0.0, %v560
      %562 = vdwg.mxu0
      %563 = vmatpush.msra.mxu0 0.0
      %564 = vmatpush.msra.mxu0 0.0
      %565 = vmatpush.msra.mxu0 0.0
      %566 = vmatpush.msra.mxu0 0.0
      %567 = vmatpush.msra.mxu0 0.0
      %568 = vmatpush.msra.mxu0 0.0
      %569 = vmatpush.msra.mxu0 0.0
      %570 = vmatpush.msra.mxu0 0.0
      %571 = vmatpush.msra.mxu0 0.0
      %572 = vmatpush.msra.mxu0 0.0
      %573 = vmatpush.msra.mxu0 0.0
      %574 = vmatpush.msra.mxu0 0.0
      %575 = vmatpush.msra.mxu0 0.0
      %576 = vmatpush.msra.mxu0 0.0
      %577 = vmatpush.msra.mxu0 0.0
      %578 = vmatpush.msra.mxu0 %v539
      %579 = vmatmul.f32.gmra.mxu0 %v535
      %v580 = vpop.f32.mrf.mxu0
      %v581 = vadd.f32 0.0, %v580
      %582 = vdwg.mxu0
      %583 = vmatpush.msra.mxu0 0.0
      %584 = vmatpush.msra.mxu0 0.0
      %585 = vmatpush.msra.mxu0 0.0
      %586 = vmatpush.msra.mxu0 0.0
      %587 = vmatpush.msra.mxu0 0.0
      %588 = vmatpush.msra.mxu0 0.0
      %589 = vmatpush.msra.mxu0 0.0
      %590 = vmatpush.msra.mxu0 0.0
      %591 = vmatpush.msra.mxu0 0.0
      %592 = vmatpush.msra.mxu0 0.0
      %593 = vmatpush.msra.mxu0 0.0
      %594 = vmatpush.msra.mxu0 0.0
      %595 = vmatpush.msra.mxu0 0.0
      %596 = vmatpush.msra.mxu0 0.0
      %597 = vmatpush.msra.mxu0 0.0
      %598 = vmatpush.msra.mxu0 %v541
      %599 = vmatmul.f32.gmra.mxu0 %v535
      %v600 = vpop.f32.mrf.mxu0
      %v601 = vadd.f32 0.0, %v600
      %602 = vdwg.mxu0
      %v603 = vadd.f32 %v516, %v561
      %v604 = vadd.f32 %v517, %v581
      %v605 = vadd.f32 %v518, %v601
      %606 = vst [vmem:[#allocation1] ss:$2 sm:$0xff] %v171
      %s607 = scalar_lea.vmem [#allocation1], 16
      %608 = vst [vmem:[%s607] ss:$2 sm:$0xff] %v172
      %v609 = vld.sshfl [vmem:[#allocation1] sm:$0xff pattern:$0x75316420]
      %v610 = vld.sshfl [vmem:[#allocation1 + $0x8] sm:$0xff pattern:$0x75316420]
      %v611 = vld.sshfl [vmem:[#allocation1 + $0x10] sm:$0xff pattern:$0x75316420]
      %612 = vrot.lane.b32.xlu0 %v609, 108
      %v613 = vpop.permute.xlu0 %612
      %614 = vrot.lane.b32.xlu0 %v610, 108
      %v615 = vpop.permute.xlu0 %614
      %616 = vrot.lane.b32.xlu0 %v611, 108
      %v617 = vpop.permute.xlu0 %616
      %vm618 = vcmask 883712
      %v619 = vsel %vm618, %v613, %v615
      %v620 = vsel %vm618, %v615, %v617
      %v622 = vsel %vm199, %v178, 0
      %v624 = vsel %vm203, %v619, 0
      %v626 = vsel %vm203, %v620, 0
      %v628 = vsel %vm203, %v617, 0
      %630 = vmatpush.msra.mxu0 0.0
      %631 = vmatpush.msra.mxu0 0.0
      %632 = vmatpush.msra.mxu0 0.0
      %633 = vmatpush.msra.mxu0 0.0
      %634 = vmatpush.msra.mxu0 0.0
      %635 = vmatpush.msra.mxu0 0.0
      %636 = vmatpush.msra.mxu0 0.0
      %637 = vmatpush.msra.mxu0 0.0
      %638 = vmatpush.msra.mxu0 0.0
      %639 = vmatpush.msra.mxu0 0.0
      %640 = vmatpush.msra.mxu0 0.0
      %641 = vmatpush.msra.mxu0 0.0
      %642 = vmatpush.msra.mxu0 0.0
      %643 = vmatpush.msra.mxu0 0.0
      %644 = vmatpush.msra.mxu0 0.0
      %645 = vmatpush.msra.mxu0 %v624
      %646 = vmatmul.f32.gmra.mxu0 %v622
      %v647 = vpop.f32.mrf.mxu0
      %v648 = vadd.f32 0.0, %v647
      %649 = vdwg.mxu0
      %650 = vmatpush.msra.mxu0 0.0
      %651 = vmatpush.msra.mxu0 0.0
      %652 = vmatpush.msra.mxu0 0.0
      %653 = vmatpush.msra.mxu0 0.0
      %654 = vmatpush.msra.mxu0 0.0
      %655 = vmatpush.msra.mxu0 0.0
      %656 = vmatpush.msra.mxu0 0.0
      %657 = vmatpush.msra.mxu0 0.0
      %658 = vmatpush.msra.mxu0 0.0
      %659 = vmatpush.msra.mxu0 0.0
      %660 = vmatpush.msra.mxu0 0.0
      %661 = vmatpush.msra.mxu0 0.0
      %662 = vmatpush.msra.mxu0 0.0
      %663 = vmatpush.msra.mxu0 0.0
      %664 = vmatpush.msra.mxu0 0.0
      %665 = vmatpush.msra.mxu0 %v626
      %666 = vmatmul.f32.gmra.mxu0 %v622
      %v667 = vpop.f32.mrf.mxu0
      %v668 = vadd.f32 0.0, %v667
      %669 = vdwg.mxu0
      %670 = vmatpush.msra.mxu0 0.0
      %671 = vmatpush.msra.mxu0 0.0
      %672 = vmatpush.msra.mxu0 0.0
      %673 = vmatpush.msra.mxu0 0.0
      %674 = vmatpush.msra.mxu0 0.0
      %675 = vmatpush.msra.mxu0 0.0
      %676 = vmatpush.msra.mxu0 0.0
      %677 = vmatpush.msra.mxu0 0.0
      %678 = vmatpush.msra.mxu0 0.0
      %679 = vmatpush.msra.mxu0 0.0
      %680 = vmatpush.msra.mxu0 0.0
      %681 = vmatpush.msra.mxu0 0.0
      %682 = vmatpush.msra.mxu0 0.0
      %683 = vmatpush.msra.mxu0 0.0
      %684 = vmatpush.msra.mxu0 0.0
      %685 = vmatpush.msra.mxu0 %v628
      %686 = vmatmul.f32.gmra.mxu0 %v622
      %v687 = vpop.f32.mrf.mxu0
      %v688 = vadd.f32 0.0, %v687
      %689 = vdwg.mxu0
      %v690 = vadd.f32 %v603, %v648
      %v691 = vadd.f32 %v604, %v668
      %v692 = vadd.f32 %v605, %v688
      %693 = vst [vmem:[#allocation1] ss:$2 sm:$0xff] %v171
      %s694 = scalar_lea.vmem [#allocation1], 16
      %695 = vst [vmem:[%s694] ss:$2 sm:$0xff] %v172
      %v696 = vld.sshfl [vmem:[#allocation1] sm:$0xff pattern:$0x75316420]
      %v697 = vld.sshfl [vmem:[#allocation1 + $0x8] sm:$0xff pattern:$0x75316420]
      %v698 = vld.sshfl [vmem:[#allocation1 + $0x10] sm:$0xff pattern:$0x75316420]
      %699 = vrot.lane.b32.xlu0 %v696, 92
      %v700 = vpop.permute.xlu0 %699
      %701 = vrot.lane.b32.xlu0 %v697, 92
      %v702 = vpop.permute.xlu0 %701
      %703 = vrot.lane.b32.xlu0 %v698, 92
      %v704 = vpop.permute.xlu0 %703
      %vm705 = vcmask 752640
      %v706 = vsel %vm705, %v700, %v702
      %v707 = vsel %vm705, %v702, %v704
      %v709 = vsel %vm199, %v179, 0
      %v711 = vsel %vm203, %v706, 0
      %v713 = vsel %vm203, %v707, 0
      %v715 = vsel %vm203, %v704, 0
      %717 = vmatpush.msra.mxu0 0.0
      %718 = vmatpush.msra.mxu0 0.0
      %719 = vmatpush.msra.mxu0 0.0
      %720 = vmatpush.msra.mxu0 0.0
      %721 = vmatpush.msra.mxu0 0.0
      %722 = vmatpush.msra.mxu0 0.0
      %723 = vmatpush.msra.mxu0 0.0
      %724 = vmatpush.msra.mxu0 0.0
      %725 = vmatpush.msra.mxu0 0.0
      %726 = vmatpush.msra.mxu0 0.0
      %727 = vmatpush.msra.mxu0 0.0
      %728 = vmatpush.msra.mxu0 0.0
      %729 = vmatpush.msra.mxu0 0.0
      %730 = vmatpush.msra.mxu0 0.0
      %731 = vmatpush.msra.mxu0 0.0
      %732 = vmatpush.msra.mxu0 %v711
      %733 = vmatmul.f32.gmra.mxu0 %v709
      %v734 = vpop.f32.mrf.mxu0
      %v735 = vadd.f32 0.0, %v734
      %736 = vdwg.mxu0
      %737 = vmatpush.msra.mxu0 0.0
      %738 = vmatpush.msra.mxu0 0.0
      %739 = vmatpush.msra.mxu0 0.0
      %740 = vmatpush.msra.mxu0 0.0
      %741 = vmatpush.msra.mxu0 0.0
      %742 = vmatpush.msra.mxu0 0.0
      %743 = vmatpush.msra.mxu0 0.0
      %744 = vmatpush.msra.mxu0 0.0
      %745 = vmatpush.msra.mxu0 0.0
      %746 = vmatpush.msra.mxu0 0.0
      %747 = vmatpush.msra.mxu0 0.0
      %748 = vmatpush.msra.mxu0 0.0
      %749 = vmatpush.msra.mxu0 0.0
      %750 = vmatpush.msra.mxu0 0.0
      %751 = vmatpush.msra.mxu0 0.0
      %752 = vmatpush.msra.mxu0 %v713
      %753 = vmatmul.f32.gmra.mxu0 %v709
      %v754 = vpop.f32.mrf.mxu0
      %v755 = vadd.f32 0.0, %v754
      %756 = vdwg.mxu0
      %757 = vmatpush.msra.mxu0 0.0
      %758 = vmatpush.msra.mxu0 0.0
      %759 = vmatpush.msra.mxu0 0.0
      %760 = vmatpush.msra.mxu0 0.0
      %761 = vmatpush.msra.mxu0 0.0
      %762 = vmatpush.msra.mxu0 0.0
      %763 = vmatpush.msra.mxu0 0.0
      %764 = vmatpush.msra.mxu0 0.0
      %765 = vmatpush.msra.mxu0 0.0
      %766 = vmatpush.msra.mxu0 0.0
      %767 = vmatpush.msra.mxu0 0.0
      %768 = vmatpush.msra.mxu0 0.0
      %769 = vmatpush.msra.mxu0 0.0
      %770 = vmatpush.msra.mxu0 0.0
      %771 = vmatpush.msra.mxu0 0.0
      %772 = vmatpush.msra.mxu0 %v715
      %773 = vmatmul.f32.gmra.mxu0 %v709
      %v774 = vpop.f32.mrf.mxu0
      %v775 = vadd.f32 0.0, %v774
      %776 = vdwg.mxu0
      %v777 = vadd.f32 %v690, %v735
      %v778 = vadd.f32 %v691, %v755
      %v779 = vadd.f32 %v692, %v775
      %780 = vst [vmem:[#allocation1] ss:$2 sm:$0xff] %v171
      %s781 = scalar_lea.vmem [#allocation1], 16
      %782 = vst [vmem:[%s781] ss:$2 sm:$0xff] %v172
      %v783 = vld.sshfl [vmem:[#allocation1] sm:$0xff pattern:$0x75316420]
      %v784 = vld.sshfl [vmem:[#allocation1 + $0x8] sm:$0xff pattern:$0x75316420]
      %v785 = vld.sshfl [vmem:[#allocation1 + $0x10] sm:$0xff pattern:$0x75316420]
      %786 = vrot.lane.b32.xlu0 %v783, 91
      %v787 = vpop.permute.xlu0 %786
      %788 = vrot.lane.b32.xlu0 %v784, 91
      %v789 = vpop.permute.xlu0 %788
      %790 = vrot.lane.b32.xlu0 %v785, 91
      %v791 = vpop.permute.xlu0 %790
      %vm792 = vcmask 744448
      %v793 = vsel %vm792, %v787, %v789
      %v794 = vsel %vm792, %v789, %v791
      %v796 = vsel %vm199, %v180, 0
      %v798 = vsel %vm203, %v793, 0
      %v800 = vsel %vm203, %v794, 0
      %v802 = vsel %vm203, %v791, 0
      %804 = vmatpush.msra.mxu0 0.0
      %805 = vmatpush.msra.mxu0 0.0
      %806 = vmatpush.msra.mxu0 0.0
      %807 = vmatpush.msra.mxu0 0.0
      %808 = vmatpush.msra.mxu0 0.0
      %809 = vmatpush.msra.mxu0 0.0
      %810 = vmatpush.msra.mxu0 0.0
      %811 = vmatpush.msra.mxu0 0.0
      %812 = vmatpush.msra.mxu0 0.0
      %813 = vmatpush.msra.mxu0 0.0
      %814 = vmatpush.msra.mxu0 0.0
      %815 = vmatpush.msra.mxu0 0.0
      %816 = vmatpush.msra.mxu0 0.0
      %817 = vmatpush.msra.mxu0 0.0
      %818 = vmatpush.msra.mxu0 0.0
      %819 = vmatpush.msra.mxu0 %v798
      %820 = vmatmul.f32.gmra.mxu0 %v796
      %v821 = vpop.f32.mrf.mxu0
      %v822 = vadd.f32 0.0, %v821
      %823 = vdwg.mxu0
      %824 = vmatpush.msra.mxu0 0.0
      %825 = vmatpush.msra.mxu0 0.0
      %826 = vmatpush.msra.mxu0 0.0
      %827 = vmatpush.msra.mxu0 0.0
      %828 = vmatpush.msra.mxu0 0.0
      %829 = vmatpush.msra.mxu0 0.0
      %830 = vmatpush.msra.mxu0 0.0
      %831 = vmatpush.msra.mxu0 0.0
      %832 = vmatpush.msra.mxu0 0.0
      %833 = vmatpush.msra.mxu0 0.0
      %834 = vmatpush.msra.mxu0 0.0
      %835 = vmatpush.msra.mxu0 0.0
      %836 = vmatpush.msra.mxu0 0.0
      %837 = vmatpush.msra.mxu0 0.0
      %838 = vmatpush.msra.mxu0 0.0
      %839 = vmatpush.msra.mxu0 %v800
      %840 = vmatmul.f32.gmra.mxu0 %v796
      %v841 = vpop.f32.mrf.mxu0
      %v842 = vadd.f32 0.0, %v841
      %843 = vdwg.mxu0
      %844 = vmatpush.msra.mxu0 0.0
      %845 = vmatpush.msra.mxu0 0.0
      %846 = vmatpush.msra.mxu0 0.0
      %847 = vmatpush.msra.mxu0 0.0
      %848 = vmatpush.msra.mxu0 0.0
      %849 = vmatpush.msra.mxu0 0.0
      %850 = vmatpush.msra.mxu0 0.0
      %851 = vmatpush.msra.mxu0 0.0
      %852 = vmatpush.msra.mxu0 0.0
      %853 = vmatpush.msra.mxu0 0.0
      %854 = vmatpush.msra.mxu0 0.0
      %855 = vmatpush.msra.mxu0 0.0
      %856 = vmatpush.msra.mxu0 0.0
      %857 = vmatpush.msra.mxu0 0.0
      %858 = vmatpush.msra.mxu0 0.0
      %859 = vmatpush.msra.mxu0 %v802
      %860 = vmatmul.f32.gmra.mxu0 %v796
      %v861 = vpop.f32.mrf.mxu0
      %v862 = vadd.f32 0.0, %v861
      %863 = vdwg.mxu0
      %v864 = vadd.f32 %v777, %v822
      %v865 = vadd.f32 %v778, %v842
      %v866 = vadd.f32 %v779, %v862
      %867 = vst [vmem:[#allocation1] ss:$2 sm:$0xff] %v171
      %s868 = scalar_lea.vmem [#allocation1], 16
      %869 = vst [vmem:[%s868] ss:$2 sm:$0xff] %v172
      %v870 = vld.sshfl [vmem:[#allocation1] sm:$0xff pattern:$0x75316420]
      %v871 = vld.sshfl [vmem:[#allocation1 + $0x8] sm:$0xff pattern:$0x75316420]
      %v872 = vld.sshfl [vmem:[#allocation1 + $0x10] sm:$0xff pattern:$0x75316420]
      %873 = vrot.lane.b32.xlu0 %v870, 90
      %v874 = vpop.permute.xlu0 %873
      %875 = vrot.lane.b32.xlu0 %v871, 90
      %v876 = vpop.permute.xlu0 %875
      %877 = vrot.lane.b32.xlu0 %v872, 90
      %v878 = vpop.permute.xlu0 %877
      %vm879 = vcmask 736256
      %v880 = vsel %vm879, %v874, %v876
      %v881 = vsel %vm879, %v876, %v878
      %v883 = vsel %vm199, %v181, 0
      %v885 = vsel %vm203, %v880, 0
      %v887 = vsel %vm203, %v881, 0
      %v889 = vsel %vm203, %v878, 0
      %891 = vmatpush.msra.mxu0 0.0
      %892 = vmatpush.msra.mxu0 0.0
      %893 = vmatpush.msra.mxu0 0.0
      %894 = vmatpush.msra.mxu0 0.0
      %895 = vmatpush.msra.mxu0 0.0
      %896 = vmatpush.msra.mxu0 0.0
      %897 = vmatpush.msra.mxu0 0.0
      %898 = vmatpush.msra.mxu0 0.0
      %899 = vmatpush.msra.mxu0 0.0
      %900 = vmatpush.msra.mxu0 0.0
      %901 = vmatpush.msra.mxu0 0.0
      %902 = vmatpush.msra.mxu0 0.0
      %903 = vmatpush.msra.mxu0 0.0
      %904 = vmatpush.msra.mxu0 0.0
      %905 = vmatpush.msra.mxu0 0.0
      %906 = vmatpush.msra.mxu0 %v885
      %907 = vmatmul.f32.gmra.mxu0 %v883
      %v908 = vpop.f32.mrf.mxu0
      %v909 = vadd.f32 0.0, %v908
      %910 = vdwg.mxu0
      %911 = vmatpush.msra.mxu0 0.0
      %912 = vmatpush.msra.mxu0 0.0
      %913 = vmatpush.msra.mxu0 0.0
      %914 = vmatpush.msra.mxu0 0.0
      %915 = vmatpush.msra.mxu0 0.0
      %916 = vmatpush.msra.mxu0 0.0
      %917 = vmatpush.msra.mxu0 0.0
      %918 = vmatpush.msra.mxu0 0.0
      %919 = vmatpush.msra.mxu0 0.0
      %920 = vmatpush.msra.mxu0 0.0
      %921 = vmatpush.msra.mxu0 0.0
      %922 = vmatpush.msra.mxu0 0.0
      %923 = vmatpush.msra.mxu0 0.0
      %924 = vmatpush.msra.mxu0 0.0
      %925 = vmatpush.msra.mxu0 0.0
      %926 = vmatpush.msra.mxu0 %v887
      %927 = vmatmul.f32.gmra.mxu0 %v883
      %v928 = vpop.f32.mrf.mxu0
      %v929 = vadd.f32 0.0, %v928
      %930 = vdwg.mxu0
      %931 = vmatpush.msra.mxu0 0.0
      %932 = vmatpush.msra.mxu0 0.0
      %933 = vmatpush.msra.mxu0 0.0
      %934 = vmatpush.msra.mxu0 0.0
      %935 = vmatpush.msra.mxu0 0.0
      %936 = vmatpush.msra.mxu0 0.0
      %937 = vmatpush.msra.mxu0 0.0
      %938 = vmatpush.msra.mxu0 0.0
      %939 = vmatpush.msra.mxu0 0.0
      %940 = vmatpush.msra.mxu0 0.0
      %941 = vmatpush.msra.mxu0 0.0
      %942 = vmatpush.msra.mxu0 0.0
      %943 = vmatpush.msra.mxu0 0.0
      %944 = vmatpush.msra.mxu0 0.0
      %945 = vmatpush.msra.mxu0 0.0
      %946 = vmatpush.msra.mxu0 %v889
      %947 = vmatmul.f32.gmra.mxu0 %v883
      %v948 = vpop.f32.mrf.mxu0
      %v949 = vadd.f32 0.0, %v948
      %950 = vdwg.mxu0
      %v951 = vadd.f32 %v864, %v909
      %v952 = vadd.f32 %v865, %v929
      %v953 = vadd.f32 %v866, %v949
      %v954 = vld [vmem:[%s2] sm:$0xff]
      %956 = vset.pattern.permute.xlu0 0
      %957 = vperm.xlu0 %956, %v954
      %v958 = vpop.permute.xlu0 %957
      %v960 = vadd.f32 %v951, %v958
      %v961 = vadd.f32 %v952, %v958
      %v962 = vadd.f32 %v953, %v958
      %v963 = vmax.f32 %v960, 0.0
      %v964 = vmax.f32 %v961, 0.0
      %v965 = vmax.f32 %v962, 0.0
      %966 = vst [vmem:[%s170] sm:$0xff] %v963
      %967 = vst [vmem:[%s170 + $0x8] sm:$0xff] %v964
      %vm968 = vcmask 261120
      %969 = vst.msk [vmem:[%s170 + $0x10] sm:$0xff] %vm968, %v965
      %p970 = scmp.lt.s32.totalorder %s14, 1
      %s971 = scalar_select %p970, %s14, 1
      %s972 = smul.addr %s971, 3
      %s973 = smul.addr %s972, 8
      %s974 = scalar_lea.vmem %s3, %s973
      // Predicated region
      $region33: #{basic_conv2d.1} parent=31 // pred_check
        %p975 = pneg %p100
      $region34: #{basic_conv2d.1} parent=31 // pred_check_branch
        %977 = sbr.rel (%p975) target = $region36
      $region35: #{basic_conv2d.1} parent=31 // pred_region
        _
      $region36: #{basic_conv2d.1} parent=31 // pred_fallthru
        _
    $region32: #{basic_conv2d.1} parent=5 // pred_fallthru
      _
    %p978 = scmp.le.s32.totalorder 2, %s9
    // Predicated region
    $region37: #{basic_conv2d.1} parent=5 // pred_check
      %p979 = pneg %p978
    $region38: #{basic_conv2d.1} parent=5 // pred_check_branch
      %981 = sbr.rel (%p979) target = $region40
    $region39: #{basic_conv2d.1} parent=5 // pred_region
      %s982 = ssub.s32 %s9, 2
      // Predicated region
      $region41: #{basic_conv2d.1} parent=39 // pred_check
        %p983 = pneg %p106
      $region42: #{basic_conv2d.1} parent=39 // pred_check_branch
        %985 = sbr.rel (%p983) target = $region44
      $region43: #{basic_conv2d.1} parent=39 // pred_region
        %p986 = scmp.lt.s32.totalorder %s15, 1
        %s987 = scalar_select %p986, %s15, 1
        %s988 = smul.addr %s987, 3
        %s989 = smul.addr %s988, 8
        %s990 = scalar_lea.vmem %s3, %s989
      $region44: #{basic_conv2d.1} parent=39 // pred_fallthru
        _
    $region40: #{basic_conv2d.1} parent=5 // pred_fallthru
      _
  $region6: #{basic_conv2d.1} parent=0 // loop_footer
    %s13 = sadd.s32 1, %s9
  $region7: #{basic_conv2d.1} parent=0 // loop_footer_branch
    %8 = sbr.rel target = $region3
  $region8: #{basic_conv2d.1} parent=0 // loop_exit
    _

</llo_original>
